<compile_context>
chip_gen: v6e
topology: v6e:2x2x1
jax: 0.10.0
libtpu: 0.0.40
codegen_flags: <defaults>
</compile_context>

<pallas_src>
import functools

import jax
import jax.numpy as jnp
from jax.experimental import pallas as pl
from jax.experimental.pallas import tpu as pltpu


def gat_attn_kernel(s1_ref, s2t_ref, g_ref, bias_ref, o_ref,
                    *, n_heads, n_hidden, slope, adj_heads):
    """Per-batch GAT attention: softmax(LeakyReLU(s1_i + s2_j) + bias) @ g_h."""
    s1 = s1_ref[0]                                        # (N, H)   f32
    s2t = s2t_ref[0]                                      # (H, N)   f32
    g = g_ref[0]                                          # (N, H*F) bf16 (MXU rhs)

    # Adjacency bias is head-shared in the common case: cast once, reuse.
    shared_bias = bias_ref[0].astype(jnp.float32) if adj_heads == 1 else None

    outs = []
    # n_heads is small here; static unroll is fine.
    # TODO(synk): for large n_heads use lax.fori_loop(..., unroll=k) to bound
    # vreg live ranges.
    for hh in range(n_heads):
        bias = shared_bias if adj_heads == 1 else bias_ref[hh].astype(jnp.float32)
        e = s1[:, hh:hh + 1] + s2t[hh:hh + 1, :]          # (N, N): s1_i + s2_j
        e = jnp.where(e >= 0, e, slope * e)               # LeakyReLU (f32 VPU)
        e = e + bias                                      # additive mask (0 / -1e30)
        m = jnp.max(e, axis=1, keepdims=True)             # softmax over neighbours j
        p = jnp.exp(e - m)
        denom = jnp.sum(p, axis=1, keepdims=True)
        a = p * pl.reciprocal(denom, approx=True)         # divide on the EUP slot
        # TODO(synk): nn.Dropout(0.1) on `a` omitted (eval-mode identity).
        gh = g[:, hh * n_hidden:(hh + 1) * n_hidden]      # (N, F) bf16
        outs.append(jnp.dot(a.astype(jnp.bfloat16), gh,
                            preferred_element_type=jnp.float32))
    # One lane-dense store of all heads (instead of H narrow masked stores).
    o_ref[0] = jnp.concatenate(outs, axis=-1).astype(o_ref.dtype)


def graph_attention_layer(h, adj_mat, w_proj, w_proj_attn, w_attn,
                          *, n_heads, is_concat=True, negative_slope=0.2):
    B, N, Din = h.shape
    HF = w_proj.shape[0]
    n_hidden = HF // n_heads
    f2 = n_hidden // 2

    h32 = jnp.asarray(h, jnp.float32)
    w_attn = jnp.asarray(w_attn, jnp.float32)

    # ---- Projections hoisted: one batched XLA matmul over B*N rows. --------
    # PyTorch Linear weights are (out, in); transpose for x @ W.
    wp = jnp.asarray(w_proj, jnp.float32).T                       # (Din, H*F)
    g = jnp.einsum('bnd,de->bne', h32, wp)                        # (B, N, H*F) f32
    g_bf = g.astype(jnp.bfloat16)                                 # bf16 MXU operand

    # Fold w_attn halves into the proj_attn weight: s1[b,n,h] = h . W1[:,h].
    wa3 = jnp.asarray(w_proj_attn, jnp.float32).T.reshape(Din, n_heads, f2)
    w1 = jnp.einsum('dhk,k->dh', wa3, w_attn[:f2])                # (Din, H)
    w2 = jnp.einsum('dhk,k->dh', wa3, w_attn[f2:])                # (Din, H)
    s1 = jnp.einsum('bnd,dh->bnh', h32, w1)                       # (B, N, H)
    s2t = jnp.einsum('bnd,dh->bhn', h32, w2)                      # (B, H, N)

    # ---- Adjacency as a bf16 additive bias; NOT broadcast over heads. ------
    adj = jnp.asarray(adj_mat, jnp.float32)
    adj_heads = adj.shape[2]
    assert adj_heads in (1, n_heads)
    adj = jnp.broadcast_to(adj, (N, N, adj_heads))
    # Finite -1e30 instead of -inf: identical after exp underflow, but avoids
    # NaNs for fully-isolated rows.
    bias = jnp.where(adj >= 0.5, 0.0, -1e30).astype(jnp.bfloat16)
    bias = jnp.transpose(bias, (2, 0, 1))                         # (Ha, N, N)

    kernel = functools.partial(gat_attn_kernel, n_heads=n_heads,
                               n_hidden=n_hidden, slope=negative_slope,
                               adj_heads=adj_heads)

    out = pl.pallas_call(
        kernel,
        out_shape=jax.ShapeDtypeStruct((B, N, HF), jnp.float32),
        grid_spec=pltpu.PrefetchScalarGridSpec(
            num_scalar_prefetch=0,
            grid=(B,),                     # batch-parallel; B>=2 uses both v7x TCs
            in_specs=[
                pl.BlockSpec((1, N, n_heads), lambda b: (b, 0, 0)),     # s1
                pl.BlockSpec((1, n_heads, N), lambda b: (b, 0, 0)),     # s2^T
                pl.BlockSpec((1, N, HF), lambda b: (b, 0, 0)),          # g (bf16)
                pl.BlockSpec((adj_heads, N, N), lambda b: (0, 0, 0)),   # mask bias
            ],
            out_specs=pl.BlockSpec((1, N, HF), lambda b: (b, 0, 0)),
        ),
        compiler_params=pltpu.CompilerParams(
            dimension_semantics=("parallel",)),
    )(s1, s2t, g_bf, bias)

    if is_concat:
        return out                                                # (B, N, H*F)
    # Non-concat branch: mean over heads (cheap glue outside the kernel).
    return out.reshape(B, N, n_heads, n_hidden).mean(axis=2)


def gat_reference(h, adj_mat, w_proj, w_proj_attn, w_attn,
                  *, n_heads, is_concat=True, slope=0.2):
    """Pure-JAX reference mirroring the PyTorch forward (dropout = identity)."""
    B, N, _ = h.shape
    F = w_proj.shape[0] // n_heads
    f2 = F // 2
    g = (h @ w_proj.T).reshape(B, N, n_heads, F)
    ga = (h @ w_proj_attn.T).reshape(B, N, n_heads, f2)
    s1 = jnp.einsum('bnhf,f->bnh', ga, w_attn[:f2])
    s2 = jnp.einsum('bnhf,f->bnh', ga, w_attn[f2:])
    e = s1[:, :, None, :] + s2[:, None, :, :]                     # (B, Ni, Nj, H)
    e = jnp.where(e >= 0, e, slope * e)
    adj = jnp.broadcast_to(adj_mat, (N, N, n_heads))
    e = jnp.where(adj[None] >= 0.5, e, -jnp.inf)
    a = jax.nn.softmax(e, axis=2)
    res = jnp.einsum('bijh,bjhf->bihf', a, g)
    if is_concat:
        return res.reshape(B, N, n_heads * F)
    return res.mean(axis=2)


if __name__ == "__main__":
    key = jax.random.PRNGKey(0)
    B, N, Din = 2, 16, 8
    n_heads, out_features = 4, 32
    n_hidden = out_features // n_heads                            # is_concat=True

    k1, k2, k3, k4, k5 = jax.random.split(key, 5)
    h = jax.random.normal(k1, (B, N, Din), jnp.float32)
    w_proj = 0.1 * jax.random.normal(k2, (n_heads * n_hidden, Din), jnp.float32)
    w_proj_attn = 0.1 * jax.random.normal(
        k3, (n_heads * n_hidden // 2, Din), jnp.float32)
    w_attn = 0.1 * jax.random.normal(k4, (n_hidden,), jnp.float32)

    # Random adjacency with guaranteed self-loops, shape (N, N, 1).
    adj = (jax.random.uniform(k5, (N, N, 1)) > 0.5).astype(jnp.float32)
    adj = jnp.maximum(adj, jnp.eye(N, dtype=jnp.float32)[:, :, None])

    out = graph_attention_layer(h, adj, w_proj, w_proj_attn, w_attn,
                                n_heads=n_heads, is_concat=True)
    out = jax.block_until_ready(out)

    ref = gat_reference(h, adj, w_proj, w_proj_attn, w_attn,
                        n_heads=n_heads, is_concat=True)
    assert out.shape == (B, N, n_heads * n_hidden)
    # bf16 MXU operands + approx reciprocal => relax tolerance vs pure-f32 ref.
    assert jnp.allclose(out, ref, atol=2e-2, rtol=2e-2)
    print("KERNEL_OK")
</pallas_src>

<mosaic_0001>
module attributes {stable_mosaic.version = 11 : i64} {
  func.func @gat_attn_kernel(%arg0: i32, %arg1: memref<1x16x4xf32, #tpu.memory_space<vmem>>, %arg2: memref<1x4x16xf32, #tpu.memory_space<vmem>>, %arg3: memref<1x16x32xbf16, #tpu.memory_space<vmem>>, %arg4: memref<1x16x16xbf16, #tpu.memory_space<vmem>>, %arg5: memref<1x16x32xf32, #tpu.memory_space<vmem>>) attributes {dimension_semantics = [#tpu.dimension_semantics<parallel>], iteration_bounds = array<i64: 2>, scalar_prefetch = 0 : i64, scratch_operands = 0 : i64, tpu.core_type = #tpu.core_type<tc>, window_params = [{transform_indices = @transform_0, window_bounds = array<i64: 1, 16, 4>}, {transform_indices = @transform_1, window_bounds = array<i64: 1, 4, 16>}, {transform_indices = @transform_2, window_bounds = array<i64: 1, 16, 32>}, {pipeline_mode = #tpu.pipeline_mode<synchronous>, transform_indices = @transform_3, window_bounds = array<i64: 1, 16, 16>}, {transform_indices = @transform_4, window_bounds = array<i64: 1, 16, 32>}]} {
    %c0 = arith.constant 0 : index
    %c0_0 = arith.constant 0 : index
    %c0_1 = arith.constant 0 : index
    %0 = vector.load %arg1[%c0, %c0_0, %c0_1] : memref<1x16x4xf32, #tpu.memory_space<vmem>>, vector<1x16x4xf32>
    %1 = vector.shape_cast %0 : vector<1x16x4xf32> to vector<16x4xf32>
    %c0_2 = arith.constant 0 : index
    %c0_3 = arith.constant 0 : index
    %c0_4 = arith.constant 0 : index
    %2 = vector.load %arg2[%c0_2, %c0_3, %c0_4] : memref<1x4x16xf32, #tpu.memory_space<vmem>>, vector<1x4x16xf32>
    %3 = vector.shape_cast %2 : vector<1x4x16xf32> to vector<4x16xf32>
    %c0_5 = arith.constant 0 : index
    %c0_6 = arith.constant 0 : index
    %c0_7 = arith.constant 0 : index
    %4 = vector.load %arg3[%c0_5, %c0_6, %c0_7] : memref<1x16x32xbf16, #tpu.memory_space<vmem>>, vector<1x16x32xbf16>
    %5 = vector.shape_cast %4 : vector<1x16x32xbf16> to vector<16x32xbf16>
    %c0_8 = arith.constant 0 : index
    %c0_9 = arith.constant 0 : index
    %c0_10 = arith.constant 0 : index
    %6 = vector.load %arg4[%c0_8, %c0_9, %c0_10] : memref<1x16x16xbf16, #tpu.memory_space<vmem>>, vector<1x16x16xbf16>
    %7 = vector.shape_cast %6 : vector<1x16x16xbf16> to vector<16x16xbf16>
    %8 = arith.extf %7 : vector<16x16xbf16> to vector<16x16xf32>
    %9 = vector.extract_strided_slice %1 {offsets = [0, 0], sizes = [16, 1], strides = [1, 1]} : vector<16x4xf32> to vector<16x1xf32>
    %10 = vector.extract_strided_slice %3 {offsets = [0, 0], sizes = [1, 16], strides = [1, 1]} : vector<4x16xf32> to vector<1x16xf32>
    %11 = vector.broadcast %9 : vector<16x1xf32> to vector<16x16xf32>
    %12 = vector.broadcast %10 : vector<1x16xf32> to vector<16x16xf32>
    %13 = arith.addf %11, %12 : vector<16x16xf32>
    %cst = arith.constant 0.000000e+00 : f32
    %14 = vector.broadcast %cst : f32 to vector<16x16xf32>
    %15 = arith.cmpf oge, %13, %14 : vector<16x16xf32>
    %cst_11 = arith.constant 2.000000e-01 : f32
    %16 = vector.broadcast %cst_11 : f32 to vector<16x16xf32>
    %17 = arith.mulf %16, %13 : vector<16x16xf32>
    %18 = arith.select %15, %13, %17 : vector<16x16xi1>, vector<16x16xf32>
    %19 = arith.addf %18, %8 : vector<16x16xf32>
    %cst_12 = arith.constant dense<0xFF800000> : vector<16xf32>
    %20 = vector.multi_reduction <maximumf>, %19, %cst_12 [1] : vector<16x16xf32> to vector<16xf32>
    %21 = vector.shape_cast %20 : vector<16xf32> to vector<16x1xf32>
    %22 = vector.broadcast %21 : vector<16x1xf32> to vector<16x16xf32>
    %23 = arith.subf %19, %22 : vector<16x16xf32>
    %24 = math.exp %23 : vector<16x16xf32>
    %cst_13 = arith.constant dense<0.000000e+00> : vector<16xf32>
    %25 = vector.multi_reduction <add>, %24, %cst_13 [1] : vector<16x16xf32> to vector<16xf32>
    %26 = vector.shape_cast %25 : vector<16xf32> to vector<16x1xf32>
    %27 = tpu.reciprocal %26 {approx = true} : vector<16x1xf32> -> vector<16x1xf32>
    %28 = vector.broadcast %27 : vector<16x1xf32> to vector<16x16xf32>
    %29 = arith.mulf %24, %28 : vector<16x16xf32>
    %30 = vector.extract_strided_slice %5 {offsets = [0, 0], sizes = [16, 8], strides = [1, 1]} : vector<16x32xbf16> to vector<16x8xbf16>
    %31 = arith.truncf %29 : vector<16x16xf32> to vector<16x16xbf16>
    %cst_14 = arith.constant dense<0.000000e+00> : vector<16x8xf32>
    %32 = tpu.matmul %31, %30, %cst_14 {dimension_numbers = #tpu.dot_dimension_numbers<[1], [0], [0], [1], [0, 0, 1, 1], [], []>} : vector<16x16xbf16>, vector<16x8xbf16>, vector<16x8xf32> -> vector<16x8xf32>
    %33 = vector.extract_strided_slice %1 {offsets = [0, 1], sizes = [16, 1], strides = [1, 1]} : vector<16x4xf32> to vector<16x1xf32>
    %34 = vector.extract_strided_slice %3 {offsets = [1, 0], sizes = [1, 16], strides = [1, 1]} : vector<4x16xf32> to vector<1x16xf32>
    %35 = vector.broadcast %33 : vector<16x1xf32> to vector<16x16xf32>
    %36 = vector.broadcast %34 : vector<1x16xf32> to vector<16x16xf32>
    %37 = arith.addf %35, %36 : vector<16x16xf32>
    %cst_15 = arith.constant 0.000000e+00 : f32
    %38 = vector.broadcast %cst_15 : f32 to vector<16x16xf32>
    %39 = arith.cmpf oge, %37, %38 : vector<16x16xf32>
    %cst_16 = arith.constant 2.000000e-01 : f32
    %40 = vector.broadcast %cst_16 : f32 to vector<16x16xf32>
    %41 = arith.mulf %40, %37 : vector<16x16xf32>
    %42 = arith.select %39, %37, %41 : vector<16x16xi1>, vector<16x16xf32>
    %43 = arith.addf %42, %8 : vector<16x16xf32>
    %cst_17 = arith.constant dense<0xFF800000> : vector<16xf32>
    %44 = vector.multi_reduction <maximumf>, %43, %cst_17 [1] : vector<16x16xf32> to vector<16xf32>
    %45 = vector.shape_cast %44 : vector<16xf32> to vector<16x1xf32>
    %46 = vector.broadcast %45 : vector<16x1xf32> to vector<16x16xf32>
    %47 = arith.subf %43, %46 : vector<16x16xf32>
    %48 = math.exp %47 : vector<16x16xf32>
    %cst_18 = arith.constant dense<0.000000e+00> : vector<16xf32>
    %49 = vector.multi_reduction <add>, %48, %cst_18 [1] : vector<16x16xf32> to vector<16xf32>
    %50 = vector.shape_cast %49 : vector<16xf32> to vector<16x1xf32>
    %51 = tpu.reciprocal %50 {approx = true} : vector<16x1xf32> -> vector<16x1xf32>
    %52 = vector.broadcast %51 : vector<16x1xf32> to vector<16x16xf32>
    %53 = arith.mulf %48, %52 : vector<16x16xf32>
    %54 = vector.extract_strided_slice %5 {offsets = [0, 8], sizes = [16, 8], strides = [1, 1]} : vector<16x32xbf16> to vector<16x8xbf16>
    %55 = arith.truncf %53 : vector<16x16xf32> to vector<16x16xbf16>
    %cst_19 = arith.constant dense<0.000000e+00> : vector<16x8xf32>
    %56 = tpu.matmul %55, %54, %cst_19 {dimension_numbers = #tpu.dot_dimension_numbers<[1], [0], [0], [1], [0, 0, 1, 1], [], []>} : vector<16x16xbf16>, vector<16x8xbf16>, vector<16x8xf32> -> vector<16x8xf32>
    %57 = vector.extract_strided_slice %1 {offsets = [0, 2], sizes = [16, 1], strides = [1, 1]} : vector<16x4xf32> to vector<16x1xf32>
    %58 = vector.extract_strided_slice %3 {offsets = [2, 0], sizes = [1, 16], strides = [1, 1]} : vector<4x16xf32> to vector<1x16xf32>
    %59 = vector.broadcast %57 : vector<16x1xf32> to vector<16x16xf32>
    %60 = vector.broadcast %58 : vector<1x16xf32> to vector<16x16xf32>
    %61 = arith.addf %59, %60 : vector<16x16xf32>
    %cst_20 = arith.constant 0.000000e+00 : f32
    %62 = vector.broadcast %cst_20 : f32 to vector<16x16xf32>
    %63 = arith.cmpf oge, %61, %62 : vector<16x16xf32>
    %cst_21 = arith.constant 2.000000e-01 : f32
    %64 = vector.broadcast %cst_21 : f32 to vector<16x16xf32>
    %65 = arith.mulf %64, %61 : vector<16x16xf32>
    %66 = arith.select %63, %61, %65 : vector<16x16xi1>, vector<16x16xf32>
    %67 = arith.addf %66, %8 : vector<16x16xf32>
    %cst_22 = arith.constant dense<0xFF800000> : vector<16xf32>
    %68 = vector.multi_reduction <maximumf>, %67, %cst_22 [1] : vector<16x16xf32> to vector<16xf32>
    %69 = vector.shape_cast %68 : vector<16xf32> to vector<16x1xf32>
    %70 = vector.broadcast %69 : vector<16x1xf32> to vector<16x16xf32>
    %71 = arith.subf %67, %70 : vector<16x16xf32>
    %72 = math.exp %71 : vector<16x16xf32>
    %cst_23 = arith.constant dense<0.000000e+00> : vector<16xf32>
    %73 = vector.multi_reduction <add>, %72, %cst_23 [1] : vector<16x16xf32> to vector<16xf32>
    %74 = vector.shape_cast %73 : vector<16xf32> to vector<16x1xf32>
    %75 = tpu.reciprocal %74 {approx = true} : vector<16x1xf32> -> vector<16x1xf32>
    %76 = vector.broadcast %75 : vector<16x1xf32> to vector<16x16xf32>
    %77 = arith.mulf %72, %76 : vector<16x16xf32>
    %78 = vector.extract_strided_slice %5 {offsets = [0, 16], sizes = [16, 8], strides = [1, 1]} : vector<16x32xbf16> to vector<16x8xbf16>
    %79 = arith.truncf %77 : vector<16x16xf32> to vector<16x16xbf16>
    %cst_24 = arith.constant dense<0.000000e+00> : vector<16x8xf32>
    %80 = tpu.matmul %79, %78, %cst_24 {dimension_numbers = #tpu.dot_dimension_numbers<[1], [0], [0], [1], [0, 0, 1, 1], [], []>} : vector<16x16xbf16>, vector<16x8xbf16>, vector<16x8xf32> -> vector<16x8xf32>
    %81 = vector.extract_strided_slice %1 {offsets = [0, 3], sizes = [16, 1], strides = [1, 1]} : vector<16x4xf32> to vector<16x1xf32>
    %82 = vector.extract_strided_slice %3 {offsets = [3, 0], sizes = [1, 16], strides = [1, 1]} : vector<4x16xf32> to vector<1x16xf32>
    %83 = vector.broadcast %81 : vector<16x1xf32> to vector<16x16xf32>
    %84 = vector.broadcast %82 : vector<1x16xf32> to vector<16x16xf32>
    %85 = arith.addf %83, %84 : vector<16x16xf32>
    %cst_25 = arith.constant 0.000000e+00 : f32
    %86 = vector.broadcast %cst_25 : f32 to vector<16x16xf32>
    %87 = arith.cmpf oge, %85, %86 : vector<16x16xf32>
    %cst_26 = arith.constant 2.000000e-01 : f32
    %88 = vector.broadcast %cst_26 : f32 to vector<16x16xf32>
    %89 = arith.mulf %88, %85 : vector<16x16xf32>
    %90 = arith.select %87, %85, %89 : vector<16x16xi1>, vector<16x16xf32>
    %91 = arith.addf %90, %8 : vector<16x16xf32>
    %cst_27 = arith.constant dense<0xFF800000> : vector<16xf32>
    %92 = vector.multi_reduction <maximumf>, %91, %cst_27 [1] : vector<16x16xf32> to vector<16xf32>
    %93 = vector.shape_cast %92 : vector<16xf32> to vector<16x1xf32>
    %94 = vector.broadcast %93 : vector<16x1xf32> to vector<16x16xf32>
    %95 = arith.subf %91, %94 : vector<16x16xf32>
    %96 = math.exp %95 : vector<16x16xf32>
    %cst_28 = arith.constant dense<0.000000e+00> : vector<16xf32>
    %97 = vector.multi_reduction <add>, %96, %cst_28 [1] : vector<16x16xf32> to vector<16xf32>
    %98 = vector.shape_cast %97 : vector<16xf32> to vector<16x1xf32>
    %99 = tpu.reciprocal %98 {approx = true} : vector<16x1xf32> -> vector<16x1xf32>
    %100 = vector.broadcast %99 : vector<16x1xf32> to vector<16x16xf32>
    %101 = arith.mulf %96, %100 : vector<16x16xf32>
    %102 = vector.extract_strided_slice %5 {offsets = [0, 24], sizes = [16, 8], strides = [1, 1]} : vector<16x32xbf16> to vector<16x8xbf16>
    %103 = arith.truncf %101 : vector<16x16xf32> to vector<16x16xbf16>
    %cst_29 = arith.constant dense<0.000000e+00> : vector<16x8xf32>
    %104 = tpu.matmul %103, %102, %cst_29 {dimension_numbers = #tpu.dot_dimension_numbers<[1], [0], [0], [1], [0, 0, 1, 1], [], []>} : vector<16x16xbf16>, vector<16x8xbf16>, vector<16x8xf32> -> vector<16x8xf32>
    %105 = tpu.concatenate %32, %56, %80, %104 in 1 : vector<16x8xf32>, vector<16x8xf32>, vector<16x8xf32>, vector<16x8xf32> -> vector<16x32xf32>
    %c0_30 = arith.constant 0 : index
    %c0_31 = arith.constant 0 : index
    %c0_32 = arith.constant 0 : index
    %106 = vector.load %arg5[%c0_30, %c0_31, %c0_32] : memref<1x16x32xf32, #tpu.memory_space<vmem>>, vector<1x16x32xf32>
    %107 = vector.shape_cast %106 : vector<1x16x32xf32> to vector<16x32xf32>
    %108 = vector.shape_cast %105 : vector<16x32xf32> to vector<1x16x32xf32>
    tpu.vector_store %arg5[%c0_30, %c0_31, %c0_32], %108 {strides = array<i32>} : memref<1x16x32xf32, #tpu.memory_space<vmem>>, vector<1x16x32xf32>,
    return
  }
  func.func @transform_0(%arg0: i32) -> (i32, i32, i32) {
    %c0_i32 = arith.constant 0 : i32
    %c0_i32_0 = arith.constant 0 : i32
    %c0_i32_1 = arith.constant 0 : i32
    return %arg0, %c0_i32, %c0_i32_0 : i32, i32, i32
  }
  func.func @transform_1(%arg0: i32) -> (i32, i32, i32) {
    %c0_i32 = arith.constant 0 : i32
    %c0_i32_0 = arith.constant 0 : i32
    %c0_i32_1 = arith.constant 0 : i32
    return %arg0, %c0_i32, %c0_i32_0 : i32, i32, i32
  }
  func.func @transform_2(%arg0: i32) -> (i32, i32, i32) {
    %c0_i32 = arith.constant 0 : i32
    %c0_i32_0 = arith.constant 0 : i32
    %c0_i32_1 = arith.constant 0 : i32
    return %arg0, %c0_i32, %c0_i32_0 : i32, i32, i32
  }
  func.func @transform_3(%arg0: i32) -> (i32, i32, i32) {
    %c0_i32 = arith.constant 0 : i32
    %c0_i32_0 = arith.constant 0 : i32
    %c0_i32_1 = arith.constant 0 : i32
    %c0_i32_2 = arith.constant 0 : i32
    return %c0_i32, %c0_i32_0, %c0_i32_1 : i32, i32, i32
  }
  func.func @transform_4(%arg0: i32) -> (i32, i32, i32) {
    %c0_i32 = arith.constant 0 : i32
    %c0_i32_0 = arith.constant 0 : i32
    %c0_i32_1 = arith.constant 0 : i32
    return %arg0, %c0_i32, %c0_i32_0 : i32, i32, i32
  }
}

</mosaic_0001>

<llo_original>
// kernel: tpu_custom_call.1
$region0: #{tpu_custom_call.1}
  #allocation0 [shape = 'u32[]', space=smem, size = 0x4, offset = 0x4, fixed_abs, tag = 'smem constant byte address 0x4 - core index']
  #allocation1 [shape = 'u32[144,128]{1,0:T(1,128)}', space=vmem, size = 0x12000, scoped, tag = 'internal scratch']
  %s0 = inlined_call_operand.vmem [shape: f32[2,16,4], index: 0, kind: input, shape index: {}]
  %s1 = inlined_call_operand.vmem [shape: f32[2,4,16], index: 1, kind: input, shape index: {}]
  %s2 = inlined_call_operand.vmem [shape: bf16[2,16,32], index: 2, kind: input, shape index: {}]
  %s3 = inlined_call_operand.vmem [shape: bf16[1,16,16], index: 3, kind: input, shape index: {}]
  %s4 = inlined_call_operand.hbm [shape: f32[2,16,32], index: 4, kind: output, shape index: {}]
  %s5 = sld [smem:[#allocation0]]
  $region49: #{tpu_custom_call.1} parent=0
    _
  %s7 = ssub.s32 1, %s5
  %s8 = scalar_select 0, %s7, %s5
  $region1: #{tpu_custom_call.1} parent=0
    #allocation2 [shape = 'u8[16384]{0}', space=vmem, size = 0x4000, scoped, tag = 'output window, operand 0']
    #allocation3 [shape = 's32[2]{0}', space=sflag, size = 0x8, scoped, tag = 'scoped memory for tpu_custom_call.1']
    %9 = vsyncpa [#allocation3], 0
    %s10 = scalar_lea.sflag [#allocation3], 1
    %11 = vsyncpa %s10, 0
    loop: start=0, step=1, limit=4
    $region2: #{tpu_custom_call.1} parent=1 // loop_pre_header
      _
    $region3: #{tpu_custom_call.1} parent=1 // loop_header
      %s13 = sphi 0, %s17
      %p14 = scmp.ge.s32.totalorder %s13, 4
      %s23 = sphi 0, %s25
      %s26 = sphi 0, %s23
      %s27 = sphi 0, %s26
      %s43 = sphi 0, %s27
      %s49 = sphi 0, %s51
      %s52 = sphi 0, %s49
      %s53 = sphi 0, %s52
      %s69 = sphi 0, %s53
      %s75 = sphi 0, %s77
      %s78 = sphi 0, %s75
      %s79 = sphi 0, %s78
      %s95 = sphi 0, %s79
      %s99 = sphi 0, %s99
      %s101 = sphi 0, %s99
      %s102 = sphi 0, %s101
      %s116 = sphi 0, %s102
      %s122 = sphi 0, %s124
      %s125 = sphi 0, %s122
      %s126 = sphi 0, %s125
      %s142 = sphi 0, %s126
    $region4: #{tpu_custom_call.1} parent=1 // loop_header_branch
      %16 = sbr.rel (%p14) target = $region8
    $region5: #{tpu_custom_call.1} parent=1 // loop_body
      %s18 = ssub.s32 %s13, 1
      %s19 = ssub.s32 %s13, 2
      %s20 = sadd.s32 %s13, 1
      %s21 = ssub.s32 %s13, %s20
      %p22 = scmp.eq.s32.totalorder %s21, 0
      %s24 = sadd.s32 %s23, 1
      %s25 = scalar_select %p22, %s23, %s24
      %p28 = pneg %p22
      %p29 = scmp.eq.s32.totalorder %s13, 1
      %p30 = por %p28, %p29
      %p31 = scmp.ne.s32.totalorder %s23, %s26
      %p32 = scmp.eq.s32.totalorder %s13, 0
      %p33 = por %p31, %p32
      %p34 = scmp.ne.s32.totalorder %s23, %s26
      %p35 = scmp.eq.s32.totalorder %s18, 1
      %p36 = por %p34, %p35
      %p37 = scmp.ne.s32.totalorder %s26, %s27
      %p38 = scmp.eq.s32.totalorder %s18, 0
      %p39 = por %p37, %p38
      %p40 = scmp.ne.s32.totalorder %s26, %s27
      %p41 = scmp.eq.s32.totalorder %s19, 1
      %p42 = por %p40, %p41
      %p44 = scmp.ne.s32.totalorder %s27, %s43
      %p45 = scmp.eq.s32.totalorder %s19, 0
      %p46 = por %p44, %p45
      %s47 = ssub.s32 %s13, %s20
      %p48 = scmp.eq.s32.totalorder %s47, 0
      %s50 = sadd.s32 %s49, 1
      %s51 = scalar_select %p48, %s49, %s50
      %p54 = pneg %p48
      %p55 = scmp.eq.s32.totalorder %s13, 1
      %p56 = por %p54, %p55
      %p57 = scmp.ne.s32.totalorder %s49, %s52
      %p58 = scmp.eq.s32.totalorder %s13, 0
      %p59 = por %p57, %p58
      %p60 = scmp.ne.s32.totalorder %s49, %s52
      %p61 = scmp.eq.s32.totalorder %s18, 1
      %p62 = por %p60, %p61
      %p63 = scmp.ne.s32.totalorder %s52, %s53
      %p64 = scmp.eq.s32.totalorder %s18, 0
      %p65 = por %p63, %p64
      %p66 = scmp.ne.s32.totalorder %s52, %s53
      %p67 = scmp.eq.s32.totalorder %s19, 1
      %p68 = por %p66, %p67
      %p70 = scmp.ne.s32.totalorder %s53, %s69
      %p71 = scmp.eq.s32.totalorder %s19, 0
      %p72 = por %p70, %p71
      %s73 = ssub.s32 %s13, %s20
      %p74 = scmp.eq.s32.totalorder %s73, 0
      %s76 = sadd.s32 %s75, 1
      %s77 = scalar_select %p74, %s75, %s76
      %p80 = pneg %p74
      %p81 = scmp.eq.s32.totalorder %s13, 1
      %p82 = por %p80, %p81
      %p83 = scmp.ne.s32.totalorder %s75, %s78
      %p84 = scmp.eq.s32.totalorder %s13, 0
      %p85 = por %p83, %p84
      %p86 = scmp.ne.s32.totalorder %s75, %s78
      %p87 = scmp.eq.s32.totalorder %s18, 1
      %p88 = por %p86, %p87
      %p89 = scmp.ne.s32.totalorder %s78, %s79
      %p90 = scmp.eq.s32.totalorder %s18, 0
      %p91 = por %p89, %p90
      %p92 = scmp.ne.s32.totalorder %s78, %s79
      %p93 = scmp.eq.s32.totalorder %s19, 1
      %p94 = por %p92, %p93
      %p96 = scmp.ne.s32.totalorder %s79, %s95
      %p97 = scmp.eq.s32.totalorder %s19, 0
      %p98 = por %p96, %p97
      %s100 = sadd.s32 %s99, 1
      %p103 = scmp.eq.s32.totalorder %s13, 1
      %p104 = scmp.ne.s32.totalorder %s99, %s101
      %p105 = scmp.eq.s32.totalorder %s13, 0
      %p106 = por %p104, %p105
      %p107 = scmp.ne.s32.totalorder %s99, %s101
      %p108 = scmp.eq.s32.totalorder %s18, 1
      %p109 = por %p107, %p108
      %p110 = scmp.ne.s32.totalorder %s101, %s102
      %p111 = scmp.eq.s32.totalorder %s18, 0
      %p112 = por %p110, %p111
      %p113 = scmp.ne.s32.totalorder %s101, %s102
      %p114 = scmp.eq.s32.totalorder %s19, 1
      %p115 = por %p113, %p114
      %p117 = scmp.ne.s32.totalorder %s102, %s116
      %p118 = scmp.eq.s32.totalorder %s19, 0
      %p119 = por %p117, %p118
      %s120 = ssub.s32 %s13, %s20
      %p121 = scmp.eq.s32.totalorder %s120, 0
      %s123 = sadd.s32 %s122, 1
      %s124 = scalar_select %p121, %s122, %s123
      %p127 = pneg %p121
      %p128 = scmp.eq.s32.totalorder %s13, 1
      %p129 = por %p127, %p128
      %p130 = scmp.ne.s32.totalorder %s122, %s125
      %p131 = scmp.eq.s32.totalorder %s13, 0
      %p132 = por %p130, %p131
      %p133 = scmp.ne.s32.totalorder %s122, %s125
      %p134 = scmp.eq.s32.totalorder %s18, 1
      %p135 = por %p133, %p134
      %p136 = scmp.ne.s32.totalorder %s125, %s126
      %p137 = scmp.eq.s32.totalorder %s18, 0
      %p138 = por %p136, %p137
      %p139 = scmp.ne.s32.totalorder %s125, %s126
      %p140 = scmp.eq.s32.totalorder %s19, 1
      %p141 = por %p139, %p140
      %p143 = scmp.ne.s32.totalorder %s126, %s142
      %p144 = scmp.eq.s32.totalorder %s19, 0
      %p145 = por %p143, %p144
      %p146 = scmp.le.s32.totalorder 1, %s13
      %p147 = scmp.lt.s32.totalorder %s13, 3
      %p148 = pnand %p146, %p147
      %p149 = pneg %p148
      // Predicated region
      $region9: #{tpu_custom_call.1} parent=5 // pred_check
        _
      $region10: #{tpu_custom_call.1} parent=5 // pred_check_branch
        %151 = sbr.rel (%p148) target = $region12
      $region11: #{tpu_custom_call.1} parent=5 // pred_region
        %s152 = ssub.s32 %s13, 1
        // Predicated region
        $region13: #{tpu_custom_call.1} parent=11 // pred_check
          %p153 = pneg %p112
        $region14: #{tpu_custom_call.1} parent=11 // pred_check_branch
          %155 = sbr.rel (%p153) target = $region16
        $region15: #{tpu_custom_call.1} parent=11 // pred_region
          _
        $region16: #{tpu_custom_call.1} parent=11 // pred_fallthru
          _
      $region12: #{tpu_custom_call.1} parent=5 // pred_fallthru
        _
      %p156 = scmp.lt.s32.totalorder %s13, 2
      // Predicated region
      $region17: #{tpu_custom_call.1} parent=5 // pred_check
        %p157 = pneg %p156
      $region18: #{tpu_custom_call.1} parent=5 // pred_check_branch
        %159 = sbr.rel (%p157) target = $region20
      $region19: #{tpu_custom_call.1} parent=5 // pred_region
        // Predicated region
        $region21: #{tpu_custom_call.1} parent=19 // pred_check
          %p160 = pneg %p33
        $region22: #{tpu_custom_call.1} parent=19 // pred_check_branch
          %162 = sbr.rel (%p160) target = $region24
        $region23: #{tpu_custom_call.1} parent=19 // pred_region
          %p163 = scmp.lt.s32.totalorder %s13, 1
          %s164 = scalar_select %p163, %s13, 1
          %s165 = smul.addr %s164, 2
          %s166 = smul.addr %s165, 8
          %s167 = scalar_lea.vmem %s0, %s166
        $region24: #{tpu_custom_call.1} parent=19 // pred_fallthru
          _
        // Predicated region
        $region25: #{tpu_custom_call.1} parent=19 // pred_check
          %p168 = pneg %p59
        $region26: #{tpu_custom_call.1} parent=19 // pred_check_branch
          %170 = sbr.rel (%p168) target = $region28
        $region27: #{tpu_custom_call.1} parent=19 // pred_region
          %p171 = scmp.lt.s32.totalorder %s13, 1
          %s172 = scalar_select %p171, %s13, 1
          %s173 = smul.addr %s172, 4
          %s174 = scalar_lea.vmem %s1, %s173
        $region28: #{tpu_custom_call.1} parent=19 // pred_fallthru
          _
        // Predicated region
        $region29: #{tpu_custom_call.1} parent=19 // pred_check
          %p175 = pneg %p85
        $region30: #{tpu_custom_call.1} parent=19 // pred_check_branch
          %177 = sbr.rel (%p175) target = $region32
        $region31: #{tpu_custom_call.1} parent=19 // pred_region
          %p178 = scmp.lt.s32.totalorder %s13, 1
          %s179 = scalar_select %p178, %s13, 1
          %s180 = smul.addr %s179, 2
          %s181 = smul.addr %s180, 4
          %s182 = scalar_lea.vmem %s2, %s181
        $region32: #{tpu_custom_call.1} parent=19 // pred_fallthru
          _
      $region20: #{tpu_custom_call.1} parent=5 // pred_fallthru
        _
      %p183 = scmp.le.s32.totalorder 1, %s13
      %p184 = scmp.lt.s32.totalorder %s13, 3
      %p185 = pnand %p183, %p184
      %p186 = pneg %p185
      // Predicated region
      $region33: #{tpu_custom_call.1} parent=5 // pred_check
        _
      $region34: #{tpu_custom_call.1} parent=5 // pred_check_branch
        %188 = sbr.rel (%p185) target = $region36
      $region35: #{tpu_custom_call.1} parent=5 // pred_region
        %s189 = ssub.s32 %s13, 1
        %p190 = scmp.lt.s32.totalorder %s18, 1
        %s191 = scalar_select %p190, %s18, 1
        %s192 = smul.addr %s191, 2
        %s193 = smul.addr %s192, 8
        %s194 = scalar_lea.vmem %s0, %s193
        %p195 = pneg %p39
        %p196 = pneg %p36
        %p197 = scmp.lt.s32.totalorder %s18, 1
        %s198 = scalar_select %p197, %s18, 1
        %s199 = smul.addr %s198, 4
        %s200 = scalar_lea.vmem %s1, %s199
        %p201 = pneg %p65
        %p202 = pneg %p62
        %p203 = scmp.lt.s32.totalorder %s18, 1
        %s204 = scalar_select %p203, %s18, 1
        %s205 = smul.addr %s204, 2
        %s206 = smul.addr %s205, 4
        %s207 = scalar_lea.vmem %s2, %s206
        %p208 = pneg %p91
        %p209 = pneg %p88
        %p210 = pneg %p112
        %p211 = pneg %p109
        %p212 = pneg %p138
        %p213 = pneg %p135
        %s214 = sand.u32 %s125, 1
        %s215 = scalar_lea.sflag [#allocation3], %s214
        %s216 = sand.u32 %s125, 1
        %s217 = smul.addr %s216, 16
        %s218 = scalar_lea.vmem [#allocation2], %s217
        %p219 = scmp.lt.s32.totalorder %s18, 1
        %s220 = scalar_select %p219, %s18, 1
        %s221 = smul.addr %s220, 2
        %s222 = smul.addr %s221, 8
        %s223 = scalar_lea.vmem %s0, %s222
        %p224 = scmp.lt.s32.totalorder %s18, 1
        %s225 = scalar_select %p224, %s18, 1
        %s226 = smul.addr %s225, 4
        %s227 = scalar_lea.vmem %s1, %s226
        %p228 = scmp.lt.s32.totalorder %s18, 1
        %s229 = scalar_select %p228, %s18, 1
        %s230 = smul.addr %s229, 2
        %s231 = smul.addr %s230, 4
        %s232 = scalar_lea.vmem %s2, %s231
        %v234 = vld [vmem:[%s223] sm:$0xff]
        %v235 = vld [vmem:[%s223 + $0x8] sm:$0xff]
        %v236 = vld [vmem:[%s227] sm:$0xf]
        %v237 = vld [vmem:[%s232] sm:$0xf]
        %v238 = vld [vmem:[%s232 + $0x4] sm:$0xf]
        %v239 = vld [vmem:[%s3] sm:$0xf]
        %v240 = vld [vmem:[%s3 + $0x4] sm:$0xf]
        %v241 = vunpack.c.l.bf16 %v239
        %v242 = vunpack.c.l.bf16 %v240
        %244 = vset.pattern.permute.xlu0 0
        %245 = vperm.xlu0 %244, %v234
        %v246 = vpop.permute.xlu0 %245
        %249 = vset.pattern.permute.xlu0 0
        %250 = vperm.xlu0 %249, %v235
        %v251 = vpop.permute.xlu0 %250
        %v253 = vlaneseq
        %v254 = vshrl.u32 %v253, 7
        %v255 = vsub.s32 0, %v254
        %v256 = vrot.slane %v236, %v255
        %v257 = vadd.f32 %v246, %v256
        %v258 = vadd.f32 %v251, %v256
        %vm259 = vcmp.ge.f32.partialorder %v257, 0.0
        %vm260 = vcmp.ge.f32.partialorder %v258, 0.0
        %v261 = vmul.f32 %v257, 0.2
        %v262 = vmul.f32 %v258, 0.2
        %v263 = vsel %vm259, %v257, %v261
        %v264 = vsel %vm260, %v258, %v262
        %v265 = vadd.f32 %v263, %v241
        %v266 = vadd.f32 %v264, %v242
        %vm267 = vcmask 130048
        %v268 = vsel %vm267, %v265, -inf
        %269 = vmax.xlane.f32.xlu0 %v268
        %v270 = vpop.xlane.xlu0 %269
        %v271 = vsel %vm267, %v266, -inf
        %272 = vmax.xlane.f32.xlu0 %v271
        %v273 = vpop.xlane.xlu0 %272
        %v274 = vsub.f32 %v265, %v270
        %v275 = vsub.f32 %v266, %v273
        %v276 = vmul.f32 %v274, 1.442695
        %v277 = vpow.pop %v276
        %v278 = vmul.f32 %v275, 1.442695
        %v279 = vpow.pop %v278
        %v280 = vsel %vm267, %v277, 0.0
        %281 = vadd.xlane.f32.xlu0 %v280
        %v282 = vpop.xlane.xlu0 %281
        %v283 = vsel %vm267, %v279, 0.0
        %284 = vadd.xlane.f32.xlu0 %v283
        %v285 = vpop.xlane.xlu0 %284
        %v286 = vrcp.pop %v282
        %v287 = vrcp.pop %v285
        %v288 = vmul.f32 %v277, %v286
        %v289 = vmul.f32 %v279, %v287
        %v290 = vpack.c.bf16 %v289, %v288
        %v293 = vunpack.c.l.b16 %v237
        %v294 = vunpack.c.l.b16 %v238
        %v295 = vpack.c.b16 %v294, %v293
        %v298 = vsel %vm267, %v290, 0
        %300 = vmatprep.subr.bf16.mxu0 0
        %301 = vmatpush1.bf16.msra.mxu0 0
        %302 = vmatprep.subr.bf16.mxu0 0
        %303 = vmatpush1.bf16.msra.mxu0 0
        %304 = vmatprep.subr.bf16.mxu0 0
        %305 = vmatpush1.bf16.msra.mxu0 0
        %306 = vmatprep.subr.bf16.mxu0 0
        %307 = vmatpush1.bf16.msra.mxu0 0
        %308 = vmatprep.subr.bf16.mxu0 0
        %309 = vmatpush1.bf16.msra.mxu0 0
        %310 = vmatprep.subr.bf16.mxu0 0
        %311 = vmatpush1.bf16.msra.mxu0 0
        %312 = vmatprep.subr.bf16.mxu0 0
        %313 = vmatpush1.bf16.msra.mxu0 0
        %314 = vmatprep.subr.bf16.mxu0 0
        %315 = vmatpush1.bf16.msra.mxu0 %v295
        %316 = vmatprep.subr.bf16.mxu0 0
        %317 = vmatpush2.bf16.msra.mxu0 0
        %318 = vmatprep.subr.bf16.mxu0 0
        %319 = vmatpush2.bf16.msra.mxu0 0
        %320 = vmatprep.subr.bf16.mxu0 0
        %321 = vmatpush2.bf16.msra.mxu0 0
        %322 = vmatprep.subr.bf16.mxu0 0
        %323 = vmatpush2.bf16.msra.mxu0 0
        %324 = vmatprep.subr.bf16.mxu0 0
        %325 = vmatpush2.bf16.msra.mxu0 0
        %326 = vmatprep.subr.bf16.mxu0 0
        %327 = vmatpush2.bf16.msra.mxu0 0
        %328 = vmatprep.subr.bf16.mxu0 0
        %329 = vmatpush2.bf16.msra.mxu0 0
        %330 = vmatprep.subr.bf16.mxu0 0
        %331 = vmatpush2.bf16.msra.mxu0 0
        %332 = vmatprep.mubr.bf16.mxu0 0
        %333 = vmatmul.mubr.bf16.gmra.mxu0 %v298
        %v334 = vpop.f32.mrf.mxu0
        %v335 = vadd.f32 0.0, %v334
        %v336 = vpop.f32.mrf.mxu0
        %v337 = vpop.f32.mrf.mxu0
        %v338 = vadd.f32 0.0, %v337
        %v339 = vpop.f32.mrf.mxu0
        %340 = vdwg.mxu0
        %341 = vset.pattern.permute.xlu0 1
        %342 = vperm.xlu0 %341, %v234
        %v343 = vpop.permute.xlu0 %342
        %345 = vset.pattern.permute.xlu0 1
        %346 = vperm.xlu0 %345, %v235
        %v347 = vpop.permute.xlu0 %346
        %v349 = vlaneseq
        %v350 = vshrl.u32 %v349, 7
        %v351 = vsub.s32 1, %v350
        %v352 = vrot.slane %v236, %v351
        %v353 = vadd.f32 %v343, %v352
        %v354 = vadd.f32 %v347, %v352
        %vm355 = vcmp.ge.f32.partialorder %v353, 0.0
        %vm356 = vcmp.ge.f32.partialorder %v354, 0.0
        %v357 = vmul.f32 %v353, 0.2
        %v358 = vmul.f32 %v354, 0.2
        %v359 = vsel %vm355, %v353, %v357
        %v360 = vsel %vm356, %v354, %v358
        %v361 = vadd.f32 %v359, %v241
        %v362 = vadd.f32 %v360, %v242
        %v363 = vsel %vm267, %v361, -inf
        %364 = vmax.xlane.f32.xlu0 %v363
        %v365 = vpop.xlane.xlu0 %364
        %v366 = vsel %vm267, %v362, -inf
        %367 = vmax.xlane.f32.xlu0 %v366
        %v368 = vpop.xlane.xlu0 %367
        %v369 = vsub.f32 %v361, %v365
        %v370 = vsub.f32 %v362, %v368
        %v371 = vmul.f32 %v369, 1.442695
        %v372 = vpow.pop %v371
        %v373 = vmul.f32 %v370, 1.442695
        %v374 = vpow.pop %v373
        %v375 = vsel %vm267, %v372, 0.0
        %376 = vadd.xlane.f32.xlu0 %v375
        %v377 = vpop.xlane.xlu0 %376
        %v378 = vsel %vm267, %v374, 0.0
        %379 = vadd.xlane.f32.xlu0 %v378
        %v380 = vpop.xlane.xlu0 %379
        %v381 = vrcp.pop %v377
        %v382 = vrcp.pop %v380
        %v383 = vmul.f32 %v372, %v381
        %v384 = vmul.f32 %v374, %v382
        %v385 = vpack.c.bf16 %v384, %v383
        %386 = vrot.lane.b32.xlu0 %v295, 120
        %v387 = vpop.permute.xlu0 %386
        %v390 = vsel %vm267, %v385, 0
        %392 = vmatprep.subr.bf16.mxu0 0
        %393 = vmatpush1.bf16.msra.mxu0 0
        %394 = vmatprep.subr.bf16.mxu0 0
        %395 = vmatpush1.bf16.msra.mxu0 0
        %396 = vmatprep.subr.bf16.mxu0 0
        %397 = vmatpush1.bf16.msra.mxu0 0
        %398 = vmatprep.subr.bf16.mxu0 0
        %399 = vmatpush1.bf16.msra.mxu0 0
        %400 = vmatprep.subr.bf16.mxu0 0
        %401 = vmatpush1.bf16.msra.mxu0 0
        %402 = vmatprep.subr.bf16.mxu0 0
        %403 = vmatpush1.bf16.msra.mxu0 0
        %404 = vmatprep.subr.bf16.mxu0 0
        %405 = vmatpush1.bf16.msra.mxu0 0
        %406 = vmatprep.subr.bf16.mxu0 0
        %407 = vmatpush1.bf16.msra.mxu0 %v387
        %408 = vmatprep.subr.bf16.mxu0 0
        %409 = vmatpush2.bf16.msra.mxu0 0
        %410 = vmatprep.subr.bf16.mxu0 0
        %411 = vmatpush2.bf16.msra.mxu0 0
        %412 = vmatprep.subr.bf16.mxu0 0
        %413 = vmatpush2.bf16.msra.mxu0 0
        %414 = vmatprep.subr.bf16.mxu0 0
        %415 = vmatpush2.bf16.msra.mxu0 0
        %416 = vmatprep.subr.bf16.mxu0 0
        %417 = vmatpush2.bf16.msra.mxu0 0
        %418 = vmatprep.subr.bf16.mxu0 0
        %419 = vmatpush2.bf16.msra.mxu0 0
        %420 = vmatprep.subr.bf16.mxu0 0
        %421 = vmatpush2.bf16.msra.mxu0 0
        %422 = vmatprep.subr.bf16.mxu0 0
        %423 = vmatpush2.bf16.msra.mxu0 0
        %424 = vmatprep.mubr.bf16.mxu0 0
        %425 = vmatmul.mubr.bf16.gmra.mxu0 %v390
        %v426 = vpop.f32.mrf.mxu0
        %v427 = vadd.f32 0.0, %v426
        %v428 = vpop.f32.mrf.mxu0
        %v429 = vpop.f32.mrf.mxu0
        %v430 = vadd.f32 0.0, %v429
        %v431 = vpop.f32.mrf.mxu0
        %432 = vdwg.mxu0
        %433 = vset.pattern.permute.xlu0 2
        %434 = vperm.xlu0 %433, %v234
        %v435 = vpop.permute.xlu0 %434
        %437 = vset.pattern.permute.xlu0 2
        %438 = vperm.xlu0 %437, %v235
        %v439 = vpop.permute.xlu0 %438
        %v441 = vlaneseq
        %v442 = vshrl.u32 %v441, 7
        %v443 = vsub.s32 2, %v442
        %v444 = vrot.slane %v236, %v443
        %v445 = vadd.f32 %v435, %v444
        %v446 = vadd.f32 %v439, %v444
        %vm447 = vcmp.ge.f32.partialorder %v445, 0.0
        %vm448 = vcmp.ge.f32.partialorder %v446, 0.0
        %v449 = vmul.f32 %v445, 0.2
        %v450 = vmul.f32 %v446, 0.2
        %v451 = vsel %vm447, %v445, %v449
        %v452 = vsel %vm448, %v446, %v450
        %v453 = vadd.f32 %v451, %v241
        %v454 = vadd.f32 %v452, %v242
        %v455 = vsel %vm267, %v453, -inf
        %456 = vmax.xlane.f32.xlu0 %v455
        %v457 = vpop.xlane.xlu0 %456
        %v458 = vsel %vm267, %v454, -inf
        %459 = vmax.xlane.f32.xlu0 %v458
        %v460 = vpop.xlane.xlu0 %459
        %v461 = vsub.f32 %v453, %v457
        %v462 = vsub.f32 %v454, %v460
        %v463 = vmul.f32 %v461, 1.442695
        %v464 = vpow.pop %v463
        %v465 = vmul.f32 %v462, 1.442695
        %v466 = vpow.pop %v465
        %v467 = vsel %vm267, %v464, 0.0
        %468 = vadd.xlane.f32.xlu0 %v467
        %v469 = vpop.xlane.xlu0 %468
        %v470 = vsel %vm267, %v466, 0.0
        %471 = vadd.xlane.f32.xlu0 %v470
        %v472 = vpop.xlane.xlu0 %471
        %v473 = vrcp.pop %v469
        %v474 = vrcp.pop %v472
        %v475 = vmul.f32 %v464, %v473
        %v476 = vmul.f32 %v466, %v474
        %v477 = vpack.c.bf16 %v476, %v475
        %478 = vrot.lane.b32.xlu0 %v295, 112
        %v479 = vpop.permute.xlu0 %478
        %v482 = vsel %vm267, %v477, 0
        %484 = vmatprep.subr.bf16.mxu0 0
        %485 = vmatpush1.bf16.msra.mxu0 0
        %486 = vmatprep.subr.bf16.mxu0 0
        %487 = vmatpush1.bf16.msra.mxu0 0
        %488 = vmatprep.subr.bf16.mxu0 0
        %489 = vmatpush1.bf16.msra.mxu0 0
        %490 = vmatprep.subr.bf16.mxu0 0
        %491 = vmatpush1.bf16.msra.mxu0 0
        %492 = vmatprep.subr.bf16.mxu0 0
        %493 = vmatpush1.bf16.msra.mxu0 0
        %494 = vmatprep.subr.bf16.mxu0 0
        %495 = vmatpush1.bf16.msra.mxu0 0
        %496 = vmatprep.subr.bf16.mxu0 0
        %497 = vmatpush1.bf16.msra.mxu0 0
        %498 = vmatprep.subr.bf16.mxu0 0
        %499 = vmatpush1.bf16.msra.mxu0 %v479
        %500 = vmatprep.subr.bf16.mxu0 0
        %501 = vmatpush2.bf16.msra.mxu0 0
        %502 = vmatprep.subr.bf16.mxu0 0
        %503 = vmatpush2.bf16.msra.mxu0 0
        %504 = vmatprep.subr.bf16.mxu0 0
        %505 = vmatpush2.bf16.msra.mxu0 0
        %506 = vmatprep.subr.bf16.mxu0 0
        %507 = vmatpush2.bf16.msra.mxu0 0
        %508 = vmatprep.subr.bf16.mxu0 0
        %509 = vmatpush2.bf16.msra.mxu0 0
        %510 = vmatprep.subr.bf16.mxu0 0
        %511 = vmatpush2.bf16.msra.mxu0 0
        %512 = vmatprep.subr.bf16.mxu0 0
        %513 = vmatpush2.bf16.msra.mxu0 0
        %514 = vmatprep.subr.bf16.mxu0 0
        %515 = vmatpush2.bf16.msra.mxu0 0
        %516 = vmatprep.mubr.bf16.mxu0 0
        %517 = vmatmul.mubr.bf16.gmra.mxu0 %v482
        %v518 = vpop.f32.mrf.mxu0
        %v519 = vadd.f32 0.0, %v518
        %v520 = vpop.f32.mrf.mxu0
        %v521 = vpop.f32.mrf.mxu0
        %v522 = vadd.f32 0.0, %v521
        %v523 = vpop.f32.mrf.mxu0
        %524 = vdwg.mxu0
        %525 = vset.pattern.permute.xlu0 3
        %526 = vperm.xlu0 %525, %v234
        %v527 = vpop.permute.xlu0 %526
        %529 = vset.pattern.permute.xlu0 3
        %530 = vperm.xlu0 %529, %v235
        %v531 = vpop.permute.xlu0 %530
        %v533 = vlaneseq
        %v534 = vshrl.u32 %v533, 7
        %v535 = vsub.s32 3, %v534
        %v536 = vrot.slane %v236, %v535
        %v537 = vadd.f32 %v527, %v536
        %v538 = vadd.f32 %v531, %v536
        %vm539 = vcmp.ge.f32.partialorder %v537, 0.0
        %vm540 = vcmp.ge.f32.partialorder %v538, 0.0
        %v541 = vmul.f32 %v537, 0.2
        %v542 = vmul.f32 %v538, 0.2
        %v543 = vsel %vm539, %v537, %v541
        %v544 = vsel %vm540, %v538, %v542
        %v545 = vadd.f32 %v543, %v241
        %v546 = vadd.f32 %v544, %v242
        %v547 = vsel %vm267, %v545, -inf
        %548 = vmax.xlane.f32.xlu0 %v547
        %v549 = vpop.xlane.xlu0 %548
        %v550 = vsel %vm267, %v546, -inf
        %551 = vmax.xlane.f32.xlu0 %v550
        %v552 = vpop.xlane.xlu0 %551
        %v553 = vsub.f32 %v545, %v549
        %v554 = vsub.f32 %v546, %v552
        %v555 = vmul.f32 %v553, 1.442695
        %v556 = vpow.pop %v555
        %v557 = vmul.f32 %v554, 1.442695
        %v558 = vpow.pop %v557
        %v559 = vsel %vm267, %v556, 0.0
        %560 = vadd.xlane.f32.xlu0 %v559
        %v561 = vpop.xlane.xlu0 %560
        %v562 = vsel %vm267, %v558, 0.0
        %563 = vadd.xlane.f32.xlu0 %v562
        %v564 = vpop.xlane.xlu0 %563
        %v565 = vrcp.pop %v561
        %v566 = vrcp.pop %v564
        %v567 = vmul.f32 %v556, %v565
        %v568 = vmul.f32 %v558, %v566
        %v569 = vpack.c.bf16 %v568, %v567
        %570 = vrot.lane.b32.xlu0 %v295, 104
        %v571 = vpop.permute.xlu0 %570
        %v574 = vsel %vm267, %v569, 0
        %576 = vmatprep.subr.bf16.mxu0 0
        %577 = vmatpush1.bf16.msra.mxu0 0
        %578 = vmatprep.subr.bf16.mxu0 0
        %579 = vmatpush1.bf16.msra.mxu0 0
        %580 = vmatprep.subr.bf16.mxu0 0
        %581 = vmatpush1.bf16.msra.mxu0 0
        %582 = vmatprep.subr.bf16.mxu0 0
        %583 = vmatpush1.bf16.msra.mxu0 0
        %584 = vmatprep.subr.bf16.mxu0 0
        %585 = vmatpush1.bf16.msra.mxu0 0
        %586 = vmatprep.subr.bf16.mxu0 0
        %587 = vmatpush1.bf16.msra.mxu0 0
        %588 = vmatprep.subr.bf16.mxu0 0
        %589 = vmatpush1.bf16.msra.mxu0 0
        %590 = vmatprep.subr.bf16.mxu0 0
        %591 = vmatpush1.bf16.msra.mxu0 %v571
        %592 = vmatprep.subr.bf16.mxu0 0
        %593 = vmatpush2.bf16.msra.mxu0 0
        %594 = vmatprep.subr.bf16.mxu0 0
        %595 = vmatpush2.bf16.msra.mxu0 0
        %596 = vmatprep.subr.bf16.mxu0 0
        %597 = vmatpush2.bf16.msra.mxu0 0
        %598 = vmatprep.subr.bf16.mxu0 0
        %599 = vmatpush2.bf16.msra.mxu0 0
        %600 = vmatprep.subr.bf16.mxu0 0
        %601 = vmatpush2.bf16.msra.mxu0 0
        %602 = vmatprep.subr.bf16.mxu0 0
        %603 = vmatpush2.bf16.msra.mxu0 0
        %604 = vmatprep.subr.bf16.mxu0 0
        %605 = vmatpush2.bf16.msra.mxu0 0
        %606 = vmatprep.subr.bf16.mxu0 0
        %607 = vmatpush2.bf16.msra.mxu0 0
        %608 = vmatprep.mubr.bf16.mxu0 0
        %609 = vmatmul.mubr.bf16.gmra.mxu0 %v574
        %v610 = vpop.f32.mrf.mxu0
        %v611 = vadd.f32 0.0, %v610
        %v612 = vpop.f32.mrf.mxu0
        %v613 = vpop.f32.mrf.mxu0
        %v614 = vadd.f32 0.0, %v613
        %v615 = vpop.f32.mrf.mxu0
        %616 = vdwg.mxu0
        %619 = vrot.lane.b32.xlu0 %v427, 8
        %v620 = vpop.permute.xlu0 %619
        %621 = vrot.lane.b32.xlu0 %v430, 8
        %v622 = vpop.permute.xlu0 %621
        %627 = vrot.lane.b32.xlu0 %v519, 16
        %v628 = vpop.permute.xlu0 %627
        %629 = vrot.lane.b32.xlu0 %v522, 16
        %v630 = vpop.permute.xlu0 %629
        %635 = vrot.lane.b32.xlu0 %v611, 24
        %v636 = vpop.permute.xlu0 %635
        %637 = vrot.lane.b32.xlu0 %v614, 24
        %v638 = vpop.permute.xlu0 %637
        %vm641 = vcmask 64512
        %v642 = vsel %vm641, %v335, %v620
        %v643 = vsel %vm641, %v338, %v622
        %v644 = vsel %vm267, %v642, %v628
        %v645 = vsel %vm267, %v643, %v630
        %vm646 = vcmask 195584
        %v647 = vsel %vm646, %v644, %v636
        %v648 = vsel %vm646, %v645, %v638
        %vm649 = vcmask 261120
        %650 = vst.msk [vmem:[%s218] sm:$0xff] %vm649, %v647
        %651 = vst.msk [vmem:[%s218 + $0x8] sm:$0xff] %vm649, %v648
        %s652 = sand.u32 %s125, 1
        %s653 = scalar_lea.sflag [#allocation3], %s652
        %s654 = sand.u32 %s125, 1
        %s655 = smul.addr %s654, 16
        %s656 = scalar_lea.vmem [#allocation2], %s655
        // Predicated region
        $region37: #{tpu_custom_call.1} parent=35 // pred_check
          %p657 = pneg %p135
        $region38: #{tpu_custom_call.1} parent=35 // pred_check_branch
          %659 = sbr.rel (%p657) target = $region40
        $region39: #{tpu_custom_call.1} parent=35 // pred_region
          %s661 = ssub.s32 256, 256
          %662 = vsyncadd %s653, %s661
          %s663 = smul.addr %s18, 2
          %s664 = smul.addr %s663, 128
          %s665 = scalar_lea.hbm %s4, %s664
          %s666 = sshll.u32 %s656, 4
          %s667 = int_to_ptr.vmem [resolvable:$true] %s666
          %672 = dma.vmem_to_hbm [thread:$0]  %s667, 256, %s665, %s653, 128, 128, 8
        $region40: #{tpu_custom_call.1} parent=35 // pred_fallthru
          _
      $region36: #{tpu_custom_call.1} parent=5 // pred_fallthru
        _
      %p673 = scmp.le.s32.totalorder 2, %s13
      // Predicated region
      $region41: #{tpu_custom_call.1} parent=5 // pred_check
        %p674 = pneg %p673
      $region42: #{tpu_custom_call.1} parent=5 // pred_check_branch
        %676 = sbr.rel (%p674) target = $region44
      $region43: #{tpu_custom_call.1} parent=5 // pred_region
        %s677 = ssub.s32 %s13, 2
        // Predicated region
        $region45: #{tpu_custom_call.1} parent=43 // pred_check
          %p678 = pneg %p141
        $region46: #{tpu_custom_call.1} parent=43 // pred_check_branch
          %680 = sbr.rel (%p678) target = $region48
        $region47: #{tpu_custom_call.1} parent=43 // pred_region
          %s681 = sand.u32 %s126, 1
          %s682 = scalar_lea.sflag [#allocation3], %s681
          %s683 = sand.u32 %s126, 1
          %s684 = smul.addr %s683, 16
          %s685 = scalar_lea.vmem [#allocation2], %s684
          %686 = dma.done %s682, 256
        $region48: #{tpu_custom_call.1} parent=43 // pred_fallthru
          _
      $region44: #{tpu_custom_call.1} parent=5 // pred_fallthru
        _
    $region6: #{tpu_custom_call.1} parent=1 // loop_footer
      %s17 = sadd.s32 1, %s13
    $region7: #{tpu_custom_call.1} parent=1 // loop_footer_branch
      %12 = sbr.rel target = $region3
    $region8: #{tpu_custom_call.1} parent=1 // loop_exit
      _
    %687 = vsyncpa [#allocation3], 1
    %s688 = scalar_lea.sflag [#allocation3], 1
    %689 = vsyncpa %s688, 1

</llo_original>
